<compile_context>
chip_gen: v6e
topology: v6e:2x2x1
jax: 0.10.0
libtpu: 0.0.40
codegen_flags: <defaults>
</compile_context>

<pallas_src>
import jax
import jax.numpy as jnp
from jax.experimental import pallas as pl
from jax.experimental.pallas import tpu as pltpu

_LANE = 128
_TM = 128            # destination-row tile (MXU M side)
_TK = 512            # source / reduction (K) tile
_NEG_SLOPE = 0.01    # F.leaky_relu default


def _round_up(v, m):
    return (v + m - 1) // m * m


def _pad2(a, rows, cols):
    return jnp.pad(a, ((0, rows - a.shape[0]), (0, cols - a.shape[1])))


# ----------------------------------------------------------------------------
# Stage 1 kernel: one-shot projection  h0 = x @ Wp^T + bp  (bf16 output).
# ----------------------------------------------------------------------------
def _proj_kernel(x_ref, wp_ref, bp_ref, h0_ref):
    h0_ref[...] = (jnp.dot(x_ref[...], wp_ref[...],
                           preferred_element_type=jnp.float32)
                   + bp_ref[...]).astype(jnp.bfloat16)


# ----------------------------------------------------------------------------
# Stage 2 kernel: K-tiled fused graph aggregation + epilogue per row tile.
#   acc rows [:TM]  = S_cheb @ h0   (ChebConv Tx_1 rows)
#   acc rows [TM:]  = A_mean @ h0   (SAGE mean-aggregated rows)
# ----------------------------------------------------------------------------
def _cell_kernel(g_ref, h0i_ref, h0k_ref, wbig_ref, bbig_ref, wl_ref, bl_ref,
                 o_ref, acc_ref):
    k = pl.program_id(1)

    @pl.when(k == 0)
    def _():
        acc_ref[...] = jnp.zeros_like(acc_ref)

    # One fused MXU call per (row tile, K tile): (2*TM, TK) @ (TK, H).
    acc_ref[...] += jnp.dot(g_ref[...], h0k_ref[...],
                            preferred_element_type=jnp.float32)

    @pl.when(k == pl.num_programs(1) - 1)
    def _():
        neg = jnp.float32(_NEG_SLOPE)
        tm = h0i_ref.shape[0]
        h_p = h0i_ref.shape[1]
        out_pad = o_ref.shape[-1]

        t1 = acc_ref[:tm].astype(jnp.bfloat16)     # Cheb Tx_1 rows
        agg = acc_ref[tm:].astype(jnp.bfloat16)    # SAGE mean-aggregated rows

        # Three accumulating dots against the row blocks of the fused
        # (3H, 2*OUT) weight -- no in-kernel concatenate / copies.
        pre = jnp.dot(h0i_ref[...], wbig_ref[0:h_p, :],
                      preferred_element_type=jnp.float32)
        pre = pre + jnp.dot(t1, wbig_ref[h_p:2 * h_p, :],
                            preferred_element_type=jnp.float32)
        pre = pre + jnp.dot(agg, wbig_ref[2 * h_p:3 * h_p, :],
                            preferred_element_type=jnp.float32)
        pre = pre + bbig_ref[...]
        act = jnp.where(pre > 0, pre, neg * pre)                  # leaky_relu

        o12 = act[:, :out_pad] + act[:, out_pad:]                 # o1 + o2
        o_ref[...] = (jnp.dot(o12.astype(jnp.bfloat16), wl_ref[...],
                              preferred_element_type=jnp.float32)
                      + bl_ref[...])                              # final linear


# ----------------------------------------------------------------------------
# Dense graph operators (edge-list scatter; built once per call in XLA glue).
# ----------------------------------------------------------------------------
def _build_cheb_operator(edge_index, edge_weight, num_nodes):
    """S_cheb = 2*L_sym/lambda_max - I with lambda_max=2 == -D^{-1/2} A D^{-1/2}.
    Self-loops removed; degree computed from the src ("row") index, exactly as
    PyG's get_laplacian does.  Entries live at [dst, src]."""
    src, dst = edge_index[0], edge_index[1]
    w = jnp.where(src != dst, edge_weight, 0.0)                  # remove self loops
    deg = jnp.zeros((num_nodes,), jnp.float32).at[src].add(w)
    deg_inv_sqrt = jnp.where(deg > 0, 1.0 / jnp.sqrt(deg), 0.0)  # guards 1/sqrt(0)
    norm_w = deg_inv_sqrt[src] * w * deg_inv_sqrt[dst]
    return jnp.zeros((num_nodes, num_nodes), jnp.float32).at[dst, src].add(-norm_w)


def _build_sage_mean_operator(edge_index, edge_weight, num_nodes):
    """A_mean[i, j] = sum of edge_weight(j->i) / (#incoming edges of i)."""
    src, dst = edge_index[0], edge_index[1]
    a = jnp.zeros((num_nodes, num_nodes), jnp.float32).at[dst, src].add(edge_weight)
    cnt = jnp.zeros((num_nodes,), jnp.float32).at[dst].add(1.0)
    inv = jnp.where(cnt > 0, 1.0 / cnt, 0.0)
    return a * inv[:, None]


# ----------------------------------------------------------------------------
# Parameters: PyTorch-style init, then one-time fuse/pad/transpose packing.
# ----------------------------------------------------------------------------
def init_params(key, cur_dim, hidden_dim, output_dim):
    ks = jax.random.split(key, 7)

    def lin(k, fan_in, fan_out):
        bound = 1.0 / jnp.sqrt(jnp.float32(fan_in))
        kw, kb = jax.random.split(k)
        w = jax.random.uniform(kw, (fan_out, fan_in), jnp.float32, -bound, bound)
        b = jax.random.uniform(kb, (fan_out,), jnp.float32, -bound, bound)
        return w, b

    wp, bp = lin(ks[0], cur_dim, hidden_dim)          # preprocessor_x
    wc0, _ = lin(ks[1], hidden_dim, output_dim)       # cheb.lins[0] (no bias)
    wc1, _ = lin(ks[2], hidden_dim, output_dim)       # cheb.lins[1] (no bias)
    _, bc = lin(ks[3], hidden_dim, output_dim)        # cheb.bias
    wrel, brel = lin(ks[4], hidden_dim, output_dim)   # sage.lin_rel (with bias)
    wroot, _ = lin(ks[5], hidden_dim, output_dim)     # sage.lin_root (no bias)
    wl, bl = lin(ks[6], output_dim, output_dim)       # final linear
    return dict(wp=wp, bp=bp, wc0=wc0, wc1=wc1, bc=bc,
                wrel=wrel, brel=brel, wroot=wroot, wl=wl, bl=bl)


def pack_params(params, cur_dim, hidden_dim, output_dim):
    """One-time packing: transpose to (in,out), zero-pad to 128-lane tiles,
    fuse the four hidden->output weight matrices into one (3H, 2*OUT) block
    matrix, and pre-cast all MXU operands to bf16 (biases stay f32)."""
    cur_p = _round_up(cur_dim, _LANE)
    h_p = _round_up(hidden_dim, _LANE)
    out_p = _round_up(output_dim, _LANE)
    p = params

    wp = _pad2(p["wp"].T, cur_p, h_p).astype(jnp.bfloat16)
    bp = _pad2(p["bp"][None, :], 1, h_p)

    # Block matrix: row blocks [h0 | t1 | agg], column blocks [o1 | o2].
    wbig = jnp.zeros((3 * h_p, 2 * out_p), jnp.float32)
    wbig = wbig.at[0:hidden_dim, 0:output_dim].set(p["wc0"].T)
    wbig = wbig.at[0:hidden_dim, out_p:out_p + output_dim].set(p["wroot"].T)
    wbig = wbig.at[h_p:h_p + hidden_dim, 0:output_dim].set(p["wc1"].T)
    wbig = wbig.at[2 * h_p:2 * h_p + hidden_dim,
                   out_p:out_p + output_dim].set(p["wrel"].T)
    wbig = wbig.astype(jnp.bfloat16)

    bbig = jnp.zeros((1, 2 * out_p), jnp.float32)
    bbig = bbig.at[0, 0:output_dim].set(p["bc"])
    bbig = bbig.at[0, out_p:out_p + output_dim].set(p["brel"])

    wl = _pad2(p["wl"].T, out_p, out_p).astype(jnp.bfloat16)
    bl = _pad2(p["bl"][None, :], 1, out_p)

    return dict(wp=wp, bp=bp, wbig=wbig, bbig=bbig, wl=wl, bl=bl,
                cur_pad=cur_p, h_pad=h_p, out_pad=out_p, output_dim=output_dim)


# ----------------------------------------------------------------------------
# Wrapper: pad, project once, build interleaved operators, K-tiled main call.
# ----------------------------------------------------------------------------
def nas_autograph_c_cell(h, x, edge_index, edge_weight, packed):
    del h  # unused by the reference forward (kept for signature parity)
    n = x.shape[0]
    cur_p, h_p, out_p = packed["cur_pad"], packed["h_pad"], packed["out_pad"]
    out_dim = packed["output_dim"]

    n_dst = _round_up(max(n, _TM), _TM)     # destination-row padding
    n_src = _round_up(max(n, _TK), _TK)     # source / K padding (>= n_dst)
    grid_n = n_dst // _TM
    grid_k = n_src // _TK
    grid_p = n_src // _TM                   # projection grid (sources)

    x_pad = _pad2(x.astype(jnp.float32), n_src, cur_p).astype(jnp.bfloat16)

    # Stage 1: h0 computed exactly ONCE (hoisted out of the main kernel).
    h0_pad = pl.pallas_call(
        _proj_kernel,
        out_shape=jax.ShapeDtypeStruct((n_src, h_p), jnp.bfloat16),
        grid=(grid_p,),
        in_specs=[pl.BlockSpec((_TM, cur_p), lambda i: (i, 0)),
                  pl.BlockSpec((cur_p, h_p), lambda i: (0, 0)),
                  pl.BlockSpec((1, h_p), lambda i: (0, 0))],
        out_specs=pl.BlockSpec((_TM, h_p), lambda i: (i, 0)),
        compiler_params=pltpu.CompilerParams(
            dimension_semantics=("parallel",)),
    )(x_pad, packed["wp"], packed["bp"])

    # Dense graph operators, interleaved PER ROW TILE as [S rows; A rows] so
    # the kernel's fused graph matmul operand is a plain 2-D block (no reshape).
    # TODO(synk): replace the O(N^2) dense bf16 operators with a CSR
    #             scalar-prefetch sparse aggregation (and per-generation
    #             int8/fp8 operator quantization) for the large-N win.
    s_cheb = _build_cheb_operator(edge_index, edge_weight, n)
    a_mean = _build_sage_mean_operator(edge_index, edge_weight, n)
    g_il = (jnp.stack([_pad2(s_cheb, n_dst, n_src),
                       _pad2(a_mean, n_dst, n_src)], axis=0)
            .reshape(2, grid_n, _TM, n_src)
            .transpose(1, 0, 2, 3)
            .reshape(2 * n_dst, n_src)
            .astype(jnp.bfloat16))

    flops = (2 * (2 * n_dst) * n_src * h_p                      # graph aggregation
             + grid_n * (3 * (2 * _TM * h_p * (2 * out_p))      # fused hidden->out
                         + 2 * _TM * out_p * out_p))            # final linear
    bytes_accessed = (g_il.size * 2                             # operator stream
                      + grid_n * n_src * h_p * 2                # h0 src rows / row tile
                      + n_dst * h_p * 2                         # h0 dst rows (once each)
                      + packed["wbig"].size * 2 + packed["wl"].size * 2
                      + (packed["bbig"].size + packed["bl"].size) * 4
                      + n_dst * out_p * 4)                      # output writeback

    o3_pad = pl.pallas_call(
        _cell_kernel,
        out_shape=jax.ShapeDtypeStruct((n_dst, out_p), jnp.float32),
        grid=(grid_n, grid_k),
        in_specs=[
            pl.BlockSpec((2 * _TM, _TK), lambda i, k: (i, k)),       # [S;A] tile
            pl.BlockSpec((_TM, h_p), lambda i, k: (i, 0)),           # h0 dst rows
            pl.BlockSpec((_TK, h_p), lambda i, k: (k, 0)),           # h0 src rows
            pl.BlockSpec((3 * h_p, 2 * out_p), lambda i, k: (0, 0)), # fused W
            pl.BlockSpec((1, 2 * out_p), lambda i, k: (0, 0)),       # fused bias
            pl.BlockSpec((out_p, out_p), lambda i, k: (0, 0)),       # final W
            pl.BlockSpec((1, out_p), lambda i, k: (0, 0)),           # final bias
        ],
        out_specs=pl.BlockSpec((_TM, out_p), lambda i, k: (i, 0)),
        scratch_shapes=[pltpu.VMEM((2 * _TM, h_p), jnp.float32)],    # accumulator
        compiler_params=pltpu.CompilerParams(
            dimension_semantics=("parallel", "arbitrary"),
            vmem_limit_bytes=48 * 1024 * 1024),
        cost_estimate=pl.CostEstimate(flops=int(flops), transcendentals=0,
                                      bytes_accessed=int(bytes_accessed)),
    )(g_il, h0_pad, h0_pad, packed["wbig"], packed["bbig"],
      packed["wl"], packed["bl"])

    his = x  # the module returns the un-preprocessed input as `his`
    return his, o3_pad[:n, :out_dim]


# ----------------------------------------------------------------------------
# Pure-JAX f32 reference (loose sanity check against the bf16 kernel).
# ----------------------------------------------------------------------------
def _reference_cell(x, edge_index, edge_weight, params):
    p = params
    n = x.shape[0]
    h0 = x @ p["wp"].T + p["bp"]
    s = _build_cheb_operator(edge_index, edge_weight, n)
    a = _build_sage_mean_operator(edge_index, edge_weight, n)
    o1 = h0 @ p["wc0"].T + (s @ h0) @ p["wc1"].T + p["bc"]
    o1 = jnp.where(o1 > 0, o1, _NEG_SLOPE * o1)
    o2 = (a @ h0) @ p["wrel"].T + p["brel"] + h0 @ p["wroot"].T
    o2 = jnp.where(o2 > 0, o2, _NEG_SLOPE * o2)
    return (o1 + o2) @ p["wl"].T + p["bl"]


# ----------------------------------------------------------------------------
# Example run.
# ----------------------------------------------------------------------------
if __name__ == "__main__":
    N = 16
    CUR_DIM = 8
    HIDDEN_DIM = 32
    OUTPUT_DIM = 16
    HIS_DIM = 8     # unused by forward, kept for parity
    # multi_head only sets self.headers; it is unused in forward.

    key = jax.random.PRNGKey(0)
    kx, kh, kesrc, kedst, kew, kp = jax.random.split(key, 6)

    x = jax.random.normal(kx, (N, CUR_DIM), jnp.float32)
    h = jax.random.normal(kh, (N, HIS_DIM), jnp.float32)

    # Edges: bidirectional ring + a few deterministic extra edges (non-negative
    # weights, no self loops).
    ring_src = jnp.arange(N, dtype=jnp.int32)
    ring_dst = (ring_src + 1) % N
    extra_src = jax.random.randint(kesrc, (8,), 0, N, jnp.int32)
    extra_off = jax.random.randint(kedst, (8,), 1, N, jnp.int32)
    extra_dst = (extra_src + extra_off) % N
    src = jnp.concatenate([ring_src, ring_dst, extra_src])
    dst = jnp.concatenate([ring_dst, ring_src, extra_dst])
    edge_index = jnp.stack([src, dst], axis=0)
    edge_weight = jax.random.uniform(kew, (src.shape[0],), jnp.float32, 0.5, 1.5)

    params = init_params(kp, CUR_DIM, HIDDEN_DIM, OUTPUT_DIM)
    packed = pack_params(params, CUR_DIM, HIDDEN_DIM, OUTPUT_DIM)

    his, o3 = nas_autograph_c_cell(h, x, edge_index, edge_weight, packed)
    jax.block_until_ready((his, o3))

    assert his.shape == (N, CUR_DIM)
    assert o3.shape == (N, OUTPUT_DIM)
    assert bool(jnp.all(jnp.isfinite(o3)))

    # Loose check vs f32 reference (kernel uses bf16 MXU inputs, f32 accumulate).
    ref = _reference_cell(x, edge_index, edge_weight, params)
    max_err = float(jnp.max(jnp.abs(o3 - ref)))
    assert max_err < 0.3, f"kernel/reference mismatch: {max_err}"

    print("KERNEL_OK")
</pallas_src>

<mosaic_0001>
module attributes {stable_mosaic.version = 11 : i64} {
  func.func @_proj_kernel(%arg0: i32, %arg1: memref<128x128xbf16, #tpu.memory_space<vmem>>, %arg2: memref<128x128xbf16, #tpu.memory_space<vmem>>, %arg3: memref<1x128xf32, #tpu.memory_space<vmem>>, %arg4: memref<128x128xbf16, #tpu.memory_space<vmem>>) attributes {dimension_semantics = [#tpu.dimension_semantics<parallel>], iteration_bounds = array<i64: 4>, scalar_prefetch = 0 : i64, scratch_operands = 0 : i64, tpu.core_type = #tpu.core_type<tc>, window_params = [{transform_indices = @transform_0, window_bounds = array<i64: 128, 128>}, {pipeline_mode = #tpu.pipeline_mode<synchronous>, transform_indices = @transform_1, window_bounds = array<i64: 128, 128>}, {pipeline_mode = #tpu.pipeline_mode<synchronous>, transform_indices = @transform_2, window_bounds = array<i64: 1, 128>}, {transform_indices = @transform_3, window_bounds = array<i64: 128, 128>}]} {
    %c0 = arith.constant 0 : index
    %c0_0 = arith.constant 0 : index
    %0 = vector.load %arg1[%c0, %c0_0] : memref<128x128xbf16, #tpu.memory_space<vmem>>, vector<128x128xbf16>
    %c0_1 = arith.constant 0 : index
    %c0_2 = arith.constant 0 : index
    %1 = vector.load %arg2[%c0_1, %c0_2] : memref<128x128xbf16, #tpu.memory_space<vmem>>, vector<128x128xbf16>
    %cst = arith.constant dense<0.000000e+00> : vector<128x128xf32>
    %2 = tpu.matmul %0, %1, %cst {dimension_numbers = #tpu.dot_dimension_numbers<[1], [0], [0], [1], [0, 0, 1, 1], [], []>} : vector<128x128xbf16>, vector<128x128xbf16>, vector<128x128xf32> -> vector<128x128xf32>
    %c0_3 = arith.constant 0 : index
    %c0_4 = arith.constant 0 : index
    %3 = vector.load %arg3[%c0_3, %c0_4] : memref<1x128xf32, #tpu.memory_space<vmem>>, vector<1x128xf32>
    %4 = vector.broadcast %3 : vector<1x128xf32> to vector<128x128xf32>
    %5 = arith.addf %2, %4 : vector<128x128xf32>
    %6 = arith.truncf %5 : vector<128x128xf32> to vector<128x128xbf16>
    %c0_5 = arith.constant 0 : index
    %c0_6 = arith.constant 0 : index
    %7 = vector.load %arg4[%c0_5, %c0_6] : memref<128x128xbf16, #tpu.memory_space<vmem>>, vector<128x128xbf16>
    tpu.vector_store %arg4[%c0_5, %c0_6], %6 {strides = array<i32>} : memref<128x128xbf16, #tpu.memory_space<vmem>>, vector<128x128xbf16>,
    return
  }
  func.func @transform_0(%arg0: i32) -> (i32, i32) {
    %c0_i32 = arith.constant 0 : i32
    %c0_i32_0 = arith.constant 0 : i32
    return %arg0, %c0_i32 : i32, i32
  }
  func.func @transform_1(%arg0: i32) -> (i32, i32) {
    %c0_i32 = arith.constant 0 : i32
    %c0_i32_0 = arith.constant 0 : i32
    %c0_i32_1 = arith.constant 0 : i32
    return %c0_i32, %c0_i32_0 : i32, i32
  }
  func.func @transform_2(%arg0: i32) -> (i32, i32) {
    %c0_i32 = arith.constant 0 : i32
    %c0_i32_0 = arith.constant 0 : i32
    %c0_i32_1 = arith.constant 0 : i32
    return %c0_i32, %c0_i32_0 : i32, i32
  }
  func.func @transform_3(%arg0: i32) -> (i32, i32) {
    %c0_i32 = arith.constant 0 : i32
    %c0_i32_0 = arith.constant 0 : i32
    return %arg0, %c0_i32 : i32, i32
  }
}

</mosaic_0001>

<llo_original>
// kernel: tpu_custom_call.1
$region0: #{tpu_custom_call.1}
  #allocation0 [shape = 'u32[]', space=smem, size = 0x4, offset = 0x4, fixed_abs, tag = 'smem constant byte address 0x4 - core index']
  #allocation1 [shape = 'u32[144,128]{1,0:T(1,128)}', space=vmem, size = 0x12000, scoped, tag = 'internal scratch']
  %s0 = inlined_call_operand.hbm [shape: bf16[512,128], index: 0, kind: input, shape index: {}]
  %s1 = inlined_call_operand.hbm [shape: bf16[128,128], index: 1, kind: input, shape index: {}]
  %s2 = inlined_call_operand.vmem [shape: f32[1,128], index: 2, kind: input, shape index: {}]
  %s3 = inlined_call_operand.hbm [shape: bf16[512,128], index: 3, kind: output, shape index: {}]
  %s4 = sld [smem:[#allocation0]]
  $region53: #{tpu_custom_call.1} parent=0
    _
  %s6 = ssub.s32 1, %s4
  %s7 = scalar_select 0, %s6, %s4
  $region1: #{tpu_custom_call.1} parent=0
    #allocation2 [shape = 'u8[65536]{0}', space=vmem, size = 0x10000, scoped, tag = 'input window, operand 0']
    #allocation3 [shape = 's32[2]{0}', space=sflag, size = 0x8, scoped, tag = 'scoped memory for tpu_custom_call.1']
    #allocation4 [shape = 's32[2]{0}', space=sflag, size = 0x8, scoped, tag = 'scoped memory for tpu_custom_call.1']
    #allocation5 [shape = 'u8[32768]{0}', space=vmem, size = 0x8000, scoped, tag = 'input window, operand 1, single buffered']
    #allocation6 [shape = 's32[1]{0}', space=sflag, size = 0x4, scoped, tag = 'scoped memory for tpu_custom_call.1']
    #allocation7 [shape = 'u8[65536]{0}', space=vmem, size = 0x10000, scoped, tag = 'output window, operand 0']
    %8 = vsyncpa [#allocation3], 0
    %s9 = scalar_lea.sflag [#allocation3], 1
    %10 = vsyncpa %s9, 0
    %11 = vsyncpa [#allocation6], 0
    %12 = vsyncpa [#allocation4], 0
    %s13 = scalar_lea.sflag [#allocation4], 1
    %14 = vsyncpa %s13, 0
    loop: start=0, step=1, limit=6
    $region2: #{tpu_custom_call.1} parent=1 // loop_pre_header
      _
    $region3: #{tpu_custom_call.1} parent=1 // loop_header
      %s16 = sphi 0, %s20
      %p17 = scmp.ge.s32.totalorder %s16, 6
      %s26 = sphi 0, %s28
      %s29 = sphi 0, %s26
      %s30 = sphi 0, %s29
      %s46 = sphi 0, %s30
      %s50 = sphi 0, %s50
      %s52 = sphi 0, %s50
      %s53 = sphi 0, %s52
      %s67 = sphi 0, %s53
      %s71 = sphi 0, %s71
      %s73 = sphi 0, %s71
      %s74 = sphi 0, %s73
      %s88 = sphi 0, %s74
      %s94 = sphi 0, %s96
      %s97 = sphi 0, %s94
      %s98 = sphi 0, %s97
      %s114 = sphi 0, %s98
    $region4: #{tpu_custom_call.1} parent=1 // loop_header_branch
      %19 = sbr.rel (%p17) target = $region8
    $region5: #{tpu_custom_call.1} parent=1 // loop_body
      %s21 = ssub.s32 %s16, 1
      %s22 = ssub.s32 %s16, 2
      %s23 = sadd.s32 %s16, 1
      %s24 = ssub.s32 %s16, %s23
      %p25 = scmp.eq.s32.totalorder %s24, 0
      %s27 = sadd.s32 %s26, 1
      %s28 = scalar_select %p25, %s26, %s27
      %p31 = pneg %p25
      %p32 = scmp.eq.s32.totalorder %s16, 3
      %p33 = por %p31, %p32
      %p34 = scmp.ne.s32.totalorder %s26, %s29
      %p35 = scmp.eq.s32.totalorder %s16, 0
      %p36 = por %p34, %p35
      %p37 = scmp.ne.s32.totalorder %s26, %s29
      %p38 = scmp.eq.s32.totalorder %s21, 3
      %p39 = por %p37, %p38
      %p40 = scmp.ne.s32.totalorder %s29, %s30
      %p41 = scmp.eq.s32.totalorder %s21, 0
      %p42 = por %p40, %p41
      %p43 = scmp.ne.s32.totalorder %s29, %s30
      %p44 = scmp.eq.s32.totalorder %s22, 3
      %p45 = por %p43, %p44
      %p47 = scmp.ne.s32.totalorder %s30, %s46
      %p48 = scmp.eq.s32.totalorder %s22, 0
      %p49 = por %p47, %p48
      %s51 = sadd.s32 %s50, 1
      %p54 = scmp.eq.s32.totalorder %s16, 3
      %p55 = scmp.ne.s32.totalorder %s50, %s52
      %p56 = scmp.eq.s32.totalorder %s16, 0
      %p57 = por %p55, %p56
      %p58 = scmp.ne.s32.totalorder %s50, %s52
      %p59 = scmp.eq.s32.totalorder %s21, 3
      %p60 = por %p58, %p59
      %p61 = scmp.ne.s32.totalorder %s52, %s53
      %p62 = scmp.eq.s32.totalorder %s21, 0
      %p63 = por %p61, %p62
      %p64 = scmp.ne.s32.totalorder %s52, %s53
      %p65 = scmp.eq.s32.totalorder %s22, 3
      %p66 = por %p64, %p65
      %p68 = scmp.ne.s32.totalorder %s53, %s67
      %p69 = scmp.eq.s32.totalorder %s22, 0
      %p70 = por %p68, %p69
      %s72 = sadd.s32 %s71, 1
      %p75 = scmp.eq.s32.totalorder %s16, 3
      %p76 = scmp.ne.s32.totalorder %s71, %s73
      %p77 = scmp.eq.s32.totalorder %s16, 0
      %p78 = por %p76, %p77
      %p79 = scmp.ne.s32.totalorder %s71, %s73
      %p80 = scmp.eq.s32.totalorder %s21, 3
      %p81 = por %p79, %p80
      %p82 = scmp.ne.s32.totalorder %s73, %s74
      %p83 = scmp.eq.s32.totalorder %s21, 0
      %p84 = por %p82, %p83
      %p85 = scmp.ne.s32.totalorder %s73, %s74
      %p86 = scmp.eq.s32.totalorder %s22, 3
      %p87 = por %p85, %p86
      %p89 = scmp.ne.s32.totalorder %s74, %s88
      %p90 = scmp.eq.s32.totalorder %s22, 0
      %p91 = por %p89, %p90
      %s92 = ssub.s32 %s16, %s23
      %p93 = scmp.eq.s32.totalorder %s92, 0
      %s95 = sadd.s32 %s94, 1
      %s96 = scalar_select %p93, %s94, %s95
      %p99 = pneg %p93
      %p100 = scmp.eq.s32.totalorder %s16, 3
      %p101 = por %p99, %p100
      %p102 = scmp.ne.s32.totalorder %s94, %s97
      %p103 = scmp.eq.s32.totalorder %s16, 0
      %p104 = por %p102, %p103
      %p105 = scmp.ne.s32.totalorder %s94, %s97
      %p106 = scmp.eq.s32.totalorder %s21, 3
      %p107 = por %p105, %p106
      %p108 = scmp.ne.s32.totalorder %s97, %s98
      %p109 = scmp.eq.s32.totalorder %s21, 0
      %p110 = por %p108, %p109
      %p111 = scmp.ne.s32.totalorder %s97, %s98
      %p112 = scmp.eq.s32.totalorder %s22, 3
      %p113 = por %p111, %p112
      %p115 = scmp.ne.s32.totalorder %s98, %s114
      %p116 = scmp.eq.s32.totalorder %s22, 0
      %p117 = por %p115, %p116
      %p118 = scmp.le.s32.totalorder 1, %s16
      %p119 = scmp.lt.s32.totalorder %s16, 5
      %p120 = pnand %p118, %p119
      %p121 = pneg %p120
      // Predicated region
      $region9: #{tpu_custom_call.1} parent=5 // pred_check
        _
      $region10: #{tpu_custom_call.1} parent=5 // pred_check_branch
        %123 = sbr.rel (%p120) target = $region12
      $region11: #{tpu_custom_call.1} parent=5 // pred_region
        %s124 = ssub.s32 %s16, 1
        // Predicated region
        $region13: #{tpu_custom_call.1} parent=11 // pred_check
          %p125 = pneg %p63
        $region14: #{tpu_custom_call.1} parent=11 // pred_check_branch
          %127 = sbr.rel (%p125) target = $region16
        $region15: #{tpu_custom_call.1} parent=11 // pred_region
          %s129 = ssub.s32 1024, 1024
          %130 = vsyncadd [#allocation6], %s129
          %s131 = sshll.u32 [#allocation5], 4
          %s132 = int_to_ptr.vmem [resolvable:$true] %s131
          %137 = dma.hbm_to_vmem [thread:$0]  %s1, 1024, %s132, [#allocation6], 64, 64, 4
        $region16: #{tpu_custom_call.1} parent=11 // pred_fallthru
          _
        // Predicated region
        $region17: #{tpu_custom_call.1} parent=11 // pred_check
          %p138 = pneg %p84
        $region18: #{tpu_custom_call.1} parent=11 // pred_check_branch
          %140 = sbr.rel (%p138) target = $region20
        $region19: #{tpu_custom_call.1} parent=11 // pred_region
          _
        $region20: #{tpu_custom_call.1} parent=11 // pred_fallthru
          _
      $region12: #{tpu_custom_call.1} parent=5 // pred_fallthru
        _
      %p141 = scmp.lt.s32.totalorder %s16, 4
      // Predicated region
      $region21: #{tpu_custom_call.1} parent=5 // pred_check
        %p142 = pneg %p141
      $region22: #{tpu_custom_call.1} parent=5 // pred_check_branch
        %144 = sbr.rel (%p142) target = $region24
      $region23: #{tpu_custom_call.1} parent=5 // pred_region
        // Predicated region
        $region25: #{tpu_custom_call.1} parent=23 // pred_check
          %p145 = pneg %p36
        $region26: #{tpu_custom_call.1} parent=23 // pred_check_branch
          %147 = sbr.rel (%p145) target = $region28
        $region27: #{tpu_custom_call.1} parent=23 // pred_region
          %s148 = sand.u32 %s26, 1
          %s149 = scalar_lea.sflag [#allocation3], %s148
          %s150 = sand.u32 %s26, 1
          %s151 = smul.addr %s150, 64
          %s152 = scalar_lea.vmem [#allocation2], %s151
          %s153 = smul.u32 16, %s16
          %s155 = ssub.s32 1024, 1024
          %156 = vsyncadd %s149, %s155
          %s157 = smul.addr %s153, 64
          %s158 = scalar_lea.hbm %s0, %s157
          %s159 = sshll.u32 %s152, 4
          %s160 = int_to_ptr.vmem [resolvable:$true] %s159
          %165 = dma.hbm_to_vmem [thread:$0]  %s158, 1024, %s160, %s149, 64, 64, 4
        $region28: #{tpu_custom_call.1} parent=23 // pred_fallthru
          _
      $region24: #{tpu_custom_call.1} parent=5 // pred_fallthru
        _
      %p166 = scmp.le.s32.totalorder 1, %s16
      %p167 = scmp.lt.s32.totalorder %s16, 5
      %p168 = pnand %p166, %p167
      %p169 = pneg %p168
      // Predicated region
      $region29: #{tpu_custom_call.1} parent=5 // pred_check
        _
      $region30: #{tpu_custom_call.1} parent=5 // pred_check_branch
        %171 = sbr.rel (%p168) target = $region32
      $region31: #{tpu_custom_call.1} parent=5 // pred_region
        %s172 = ssub.s32 %s16, 1
        %s173 = sand.u32 %s29, 1
        %s174 = scalar_lea.sflag [#allocation3], %s173
        %s175 = sand.u32 %s29, 1
        %s176 = smul.addr %s175, 64
        %s177 = scalar_lea.vmem [#allocation2], %s176
        // Predicated region
        $region33: #{tpu_custom_call.1} parent=31 // pred_check
          %p178 = pneg %p42
        $region34: #{tpu_custom_call.1} parent=31 // pred_check_branch
          %180 = sbr.rel (%p178) target = $region36
        $region35: #{tpu_custom_call.1} parent=31 // pred_region
          %181 = dma.done %s174, 1024
        $region36: #{tpu_custom_call.1} parent=31 // pred_fallthru
          _
        // Predicated region
        $region37: #{tpu_custom_call.1} parent=31 // pred_check
          %p182 = pneg %p63
        $region38: #{tpu_custom_call.1} parent=31 // pred_check_branch
          %184 = sbr.rel (%p182) target = $region40
        $region39: #{tpu_custom_call.1} parent=31 // pred_region
          %185 = dma.done [#allocation6], 1024
        $region40: #{tpu_custom_call.1} parent=31 // pred_fallthru
          _
        %s186 = sand.u32 %s29, 1
        %s187 = scalar_lea.sflag [#allocation3], %s186
        %s188 = sand.u32 %s29, 1
        %s189 = smul.addr %s188, 64
        %s190 = scalar_lea.vmem [#allocation2], %s189
        %p191 = pneg %p42
        %p192 = pneg %p39
        %p193 = pneg %p63
        %p194 = pneg %p60
        %p195 = pneg %p84
        %p196 = pneg %p81
        %p197 = pneg %p110
        %p198 = pneg %p107
        %s199 = sand.u32 %s97, 1
        %s200 = scalar_lea.sflag [#allocation4], %s199
        %s201 = sand.u32 %s97, 1
        %s202 = smul.addr %s201, 64
        %s203 = scalar_lea.vmem [#allocation7], %s202
        %s204 = smul.u32 16, %s21
        %s205 = smul.u32 16, %s21
        %v207 = vld [vmem:[%s177] sm:$0xf]
        %v208 = vld [vmem:[%s177 + $0x4] sm:$0xf]
        %v209 = vld [vmem:[%s177 + $0x8] sm:$0xf]
        %v210 = vld [vmem:[%s177 + $0xc] sm:$0xf]
        %v211 = vld [vmem:[%s177 + $0x10] sm:$0xf]
        %v212 = vld [vmem:[%s177 + $0x14] sm:$0xf]
        %v213 = vld [vmem:[%s177 + $0x18] sm:$0xf]
        %v214 = vld [vmem:[%s177 + $0x1c] sm:$0xf]
        %v215 = vld [vmem:[%s177 + $0x20] sm:$0xf]
        %v216 = vld [vmem:[%s177 + $0x24] sm:$0xf]
        %v217 = vld [vmem:[%s177 + $0x28] sm:$0xf]
        %v218 = vld [vmem:[%s177 + $0x2c] sm:$0xf]
        %v219 = vld [vmem:[%s177 + $0x30] sm:$0xf]
        %v220 = vld [vmem:[%s177 + $0x34] sm:$0xf]
        %v221 = vld [vmem:[%s177 + $0x38] sm:$0xf]
        %v222 = vld [vmem:[%s177 + $0x3c] sm:$0xf]
        %v223 = vld [vmem:[#allocation5] sm:$0xf]
        %v224 = vld [vmem:[#allocation5 + $0x4] sm:$0xf]
        %v225 = vld [vmem:[#allocation5 + $0x8] sm:$0xf]
        %v226 = vld [vmem:[#allocation5 + $0xc] sm:$0xf]
        %v227 = vld [vmem:[#allocation5 + $0x10] sm:$0xf]
        %v228 = vld [vmem:[#allocation5 + $0x14] sm:$0xf]
        %v229 = vld [vmem:[#allocation5 + $0x18] sm:$0xf]
        %v230 = vld [vmem:[#allocation5 + $0x1c] sm:$0xf]
        %v231 = vld [vmem:[#allocation5 + $0x20] sm:$0xf]
        %v232 = vld [vmem:[#allocation5 + $0x24] sm:$0xf]
        %v233 = vld [vmem:[#allocation5 + $0x28] sm:$0xf]
        %v234 = vld [vmem:[#allocation5 + $0x2c] sm:$0xf]
        %v235 = vld [vmem:[#allocation5 + $0x30] sm:$0xf]
        %v236 = vld [vmem:[#allocation5 + $0x34] sm:$0xf]
        %v237 = vld [vmem:[#allocation5 + $0x38] sm:$0xf]
        %v238 = vld [vmem:[#allocation5 + $0x3c] sm:$0xf]
        %v239 = vld [vmem:[%s2] sm:$0x1]
        %v241 = vlaneseq
        %v242 = vshrl.u32 %v241, 7
        %v243 = vsub.s32 0, %v242
        %v244 = vrot.slane %v239, %v243
        %v262 = vunpack.c.l.b16 %v207
        %v263 = vunpack.c.l.b16 %v208
        %v264 = vunpack.c.l.b16 %v209
        %v265 = vunpack.c.l.b16 %v210
        %v266 = vunpack.c.l.b16 %v211
        %v267 = vunpack.c.l.b16 %v212
        %v268 = vunpack.c.l.b16 %v213
        %v269 = vunpack.c.l.b16 %v214
        %v270 = vunpack.c.l.b16 %v215
        %v271 = vunpack.c.l.b16 %v216
        %v272 = vunpack.c.l.b16 %v217
        %v273 = vunpack.c.l.b16 %v218
        %v274 = vunpack.c.l.b16 %v219
        %v275 = vunpack.c.l.b16 %v220
        %v276 = vunpack.c.l.b16 %v221
        %v277 = vunpack.c.l.b16 %v222
        %v278 = vpack.c.b16 %v263, %v262
        %v279 = vpack.c.b16 %v265, %v264
        %v280 = vpack.c.b16 %v267, %v266
        %v281 = vpack.c.b16 %v269, %v268
        %v282 = vpack.c.b16 %v271, %v270
        %v283 = vpack.c.b16 %v273, %v272
        %v284 = vpack.c.b16 %v275, %v274
        %v285 = vpack.c.b16 %v277, %v276
        %v310 = vunpack.c.l.b16 %v223
        %v311 = vunpack.c.l.b16 %v224
        %v312 = vunpack.c.l.b16 %v225
        %v313 = vunpack.c.l.b16 %v226
        %v314 = vunpack.c.l.b16 %v227
        %v315 = vunpack.c.l.b16 %v228
        %v316 = vunpack.c.l.b16 %v229
        %v317 = vunpack.c.l.b16 %v230
        %v318 = vunpack.c.l.b16 %v231
        %v319 = vunpack.c.l.b16 %v232
        %v320 = vunpack.c.l.b16 %v233
        %v321 = vunpack.c.l.b16 %v234
        %v322 = vunpack.c.l.b16 %v235
        %v323 = vunpack.c.l.b16 %v236
        %v324 = vunpack.c.l.b16 %v237
        %v325 = vunpack.c.l.b16 %v238
        %v326 = vpack.c.b16 %v311, %v310
        %v327 = vpack.c.b16 %v313, %v312
        %v328 = vpack.c.b16 %v315, %v314
        %v329 = vpack.c.b16 %v317, %v316
        %v330 = vpack.c.b16 %v319, %v318
        %v331 = vpack.c.b16 %v321, %v320
        %v332 = vpack.c.b16 %v323, %v322
        %v333 = vpack.c.b16 %v325, %v324
        %342 = vmatprep.subr.bf16.mxu0 0
        %343 = vmatpush1.bf16.msra.mxu0 %v333
        %344 = vmatprep.subr.bf16.mxu0 0
        %345 = vmatpush1.bf16.msra.mxu0 %v332
        %346 = vmatprep.subr.bf16.mxu0 0
        %347 = vmatpush1.bf16.msra.mxu0 %v331
        %348 = vmatprep.subr.bf16.mxu0 0
        %349 = vmatpush1.bf16.msra.mxu0 %v330
        %350 = vmatprep.subr.bf16.mxu0 0
        %351 = vmatpush1.bf16.msra.mxu0 %v329
        %352 = vmatprep.subr.bf16.mxu0 0
        %353 = vmatpush1.bf16.msra.mxu0 %v328
        %354 = vmatprep.subr.bf16.mxu0 0
        %355 = vmatpush1.bf16.msra.mxu0 %v327
        %356 = vmatprep.subr.bf16.mxu0 0
        %357 = vmatpush1.bf16.msra.mxu0 %v326
        %358 = vmatprep.subr.bf16.mxu0 0
        %359 = vmatpush2.bf16.msra.mxu0 0
        %360 = vmatprep.subr.bf16.mxu0 0
        %361 = vmatpush2.bf16.msra.mxu0 0
        %362 = vmatprep.subr.bf16.mxu0 0
        %363 = vmatpush2.bf16.msra.mxu0 0
        %364 = vmatprep.subr.bf16.mxu0 0
        %365 = vmatpush2.bf16.msra.mxu0 0
        %366 = vmatprep.subr.bf16.mxu0 0
        %367 = vmatpush2.bf16.msra.mxu0 0
        %368 = vmatprep.subr.bf16.mxu0 0
        %369 = vmatpush2.bf16.msra.mxu0 0
        %370 = vmatprep.subr.bf16.mxu0 0
        %371 = vmatpush2.bf16.msra.mxu0 0
        %372 = vmatprep.subr.bf16.mxu0 0
        %373 = vmatpush2.bf16.msra.mxu0 0
        %374 = vmatprep.mubr.bf16.mxu0 0
        %375 = vmatmul.mubr.bf16.gmra.mxu0 %v278
        %v376 = vpop.f32.mrf.mxu0
        %v377 = vadd.f32 %v244, %v376
        %v378 = vpop.f32.mrf.mxu0
        %v379 = vpop.f32.mrf.mxu0
        %v380 = vadd.f32 %v244, %v379
        %v381 = vpop.f32.mrf.mxu0
        %382 = vmatprep.mubr.bf16.mxu0 0
        %383 = vmatmul.mubr.bf16.gmra.mxu0 %v279
        %v384 = vpop.f32.mrf.mxu0
        %v385 = vadd.f32 %v244, %v384
        %v386 = vpop.f32.mrf.mxu0
        %v387 = vpop.f32.mrf.mxu0
        %v388 = vadd.f32 %v244, %v387
        %v389 = vpop.f32.mrf.mxu0
        %390 = vmatprep.mubr.bf16.mxu0 0
        %391 = vmatmul.mubr.bf16.gmra.mxu0 %v280
        %v392 = vpop.f32.mrf.mxu0
        %v393 = vadd.f32 %v244, %v392
        %v394 = vpop.f32.mrf.mxu0
        %v395 = vpop.f32.mrf.mxu0
        %v396 = vadd.f32 %v244, %v395
        %v397 = vpop.f32.mrf.mxu0
        %398 = vmatprep.mubr.bf16.mxu0 0
        %399 = vmatmul.mubr.bf16.gmra.mxu0 %v281
        %v400 = vpop.f32.mrf.mxu0
        %v401 = vadd.f32 %v244, %v400
        %v402 = vpop.f32.mrf.mxu0
        %v403 = vpop.f32.mrf.mxu0
        %v404 = vadd.f32 %v244, %v403
        %v405 = vpop.f32.mrf.mxu0
        %406 = vmatprep.mubr.bf16.mxu0 0
        %407 = vmatmul.mubr.bf16.gmra.mxu0 %v282
        %v408 = vpop.f32.mrf.mxu0
        %v409 = vadd.f32 %v244, %v408
        %v410 = vpop.f32.mrf.mxu0
        %v411 = vpop.f32.mrf.mxu0
        %v412 = vadd.f32 %v244, %v411
        %v413 = vpop.f32.mrf.mxu0
        %414 = vmatprep.mubr.bf16.mxu0 0
        %415 = vmatmul.mubr.bf16.gmra.mxu0 %v283
        %v416 = vpop.f32.mrf.mxu0
        %v417 = vadd.f32 %v244, %v416
        %v418 = vpop.f32.mrf.mxu0
        %v419 = vpop.f32.mrf.mxu0
        %v420 = vadd.f32 %v244, %v419
        %v421 = vpop.f32.mrf.mxu0
        %422 = vmatprep.mubr.bf16.mxu0 0
        %423 = vmatmul.mubr.bf16.gmra.mxu0 %v284
        %v424 = vpop.f32.mrf.mxu0
        %v425 = vadd.f32 %v244, %v424
        %v426 = vpop.f32.mrf.mxu0
        %v427 = vpop.f32.mrf.mxu0
        %v428 = vadd.f32 %v244, %v427
        %v429 = vpop.f32.mrf.mxu0
        %430 = vmatprep.mubr.bf16.mxu0 0
        %431 = vmatmul.mubr.bf16.gmra.mxu0 %v285
        %v432 = vpop.f32.mrf.mxu0
        %v433 = vadd.f32 %v244, %v432
        %v434 = vpop.f32.mrf.mxu0
        %v435 = vpop.f32.mrf.mxu0
        %v436 = vadd.f32 %v244, %v435
        %v437 = vpop.f32.mrf.mxu0
        %438 = vdwg.mxu0
        %v439 = vpack.c.bf16 %v380, %v377
        %v440 = vpack.c.bf16 %v388, %v385
        %v441 = vpack.c.bf16 %v396, %v393
        %v442 = vpack.c.bf16 %v404, %v401
        %v443 = vpack.c.bf16 %v412, %v409
        %v444 = vpack.c.bf16 %v420, %v417
        %v445 = vpack.c.bf16 %v428, %v425
        %v446 = vpack.c.bf16 %v436, %v433
        %v455 = vunpack.c.l.b16 %v439
        %v456 = vunpack.c.h.b16 %v439
        %v457 = vunpack.c.l.b16 %v440
        %v458 = vunpack.c.h.b16 %v440
        %v459 = vunpack.c.l.b16 %v441
        %v460 = vunpack.c.h.b16 %v441
        %v461 = vunpack.c.l.b16 %v442
        %v462 = vunpack.c.h.b16 %v442
        %v463 = vunpack.c.l.b16 %v443
        %v464 = vunpack.c.h.b16 %v443
        %v465 = vunpack.c.l.b16 %v444
        %v466 = vunpack.c.h.b16 %v444
        %v467 = vunpack.c.l.b16 %v445
        %v468 = vunpack.c.h.b16 %v445
        %v469 = vunpack.c.l.b16 %v446
        %v470 = vunpack.c.h.b16 %v446
        %v471 = vpack.c.b16 %v455, %v455
        %v472 = vpack.c.b16 %v456, %v456
        %v473 = vpack.c.b16 %v457, %v457
        %v474 = vpack.c.b16 %v458, %v458
        %v475 = vpack.c.b16 %v459, %v459
        %v476 = vpack.c.b16 %v460, %v460
        %v477 = vpack.c.b16 %v461, %v461
        %v478 = vpack.c.b16 %v462, %v462
        %v479 = vpack.c.b16 %v463, %v463
        %v480 = vpack.c.b16 %v464, %v464
        %v481 = vpack.c.b16 %v465, %v465
        %v482 = vpack.c.b16 %v466, %v466
        %v483 = vpack.c.b16 %v467, %v467
        %v484 = vpack.c.b16 %v468, %v468
        %v485 = vpack.c.b16 %v469, %v469
        %v486 = vpack.c.b16 %v470, %v470
        %503 = vst [vmem:[%s203] sm:$0xf] %v471
        %504 = vst [vmem:[%s203 + $0x4] sm:$0xf] %v472
        %505 = vst [vmem:[%s203 + $0x8] sm:$0xf] %v473
        %506 = vst [vmem:[%s203 + $0xc] sm:$0xf] %v474
        %507 = vst [vmem:[%s203 + $0x10] sm:$0xf] %v475
        %508 = vst [vmem:[%s203 + $0x14] sm:$0xf] %v476
        %509 = vst [vmem:[%s203 + $0x18] sm:$0xf] %v477
        %510 = vst [vmem:[%s203 + $0x1c] sm:$0xf] %v478
        %511 = vst [vmem:[%s203 + $0x20] sm:$0xf] %v479
        %512 = vst [vmem:[%s203 + $0x24] sm:$0xf] %v480
        %513 = vst [vmem:[%s203 + $0x28] sm:$0xf] %v481
        %514 = vst [vmem:[%s203 + $0x2c] sm:$0xf] %v482
        %515 = vst [vmem:[%s203 + $0x30] sm:$0xf] %v483
        %516 = vst [vmem:[%s203 + $0x34] sm:$0xf] %v484
        %517 = vst [vmem:[%s203 + $0x38] sm:$0xf] %v485
        %518 = vst [vmem:[%s203 + $0x3c] sm:$0xf] %v486
        %s519 = sand.u32 %s97, 1
        %s520 = scalar_lea.sflag [#allocation4], %s519
        %s521 = sand.u32 %s97, 1
        %s522 = smul.addr %s521, 64
        %s523 = scalar_lea.vmem [#allocation7], %s522
        // Predicated region
        $region41: #{tpu_custom_call.1} parent=31 // pred_check
          %p524 = pneg %p107
        $region42: #{tpu_custom_call.1} parent=31 // pred_check_branch
          %526 = sbr.rel (%p524) target = $region44
        $region43: #{tpu_custom_call.1} parent=31 // pred_region
          %s527 = smul.u32 16, %s21
          %s529 = ssub.s32 1024, 1024
          %530 = vsyncadd %s520, %s529
          %s531 = smul.addr %s527, 64
          %s532 = scalar_lea.hbm %s3, %s531
          %s533 = sshll.u32 %s523, 4
          %s534 = int_to_ptr.vmem [resolvable:$true] %s533
          %539 = dma.vmem_to_hbm [thread:$0]  %s534, 1024, %s532, %s520, 64, 64, 4
        $region44: #{tpu_custom_call.1} parent=31 // pred_fallthru
          _
      $region32: #{tpu_custom_call.1} parent=5 // pred_fallthru
        _
      %p540 = scmp.le.s32.totalorder 2, %s16
      // Predicated region
      $region45: #{tpu_custom_call.1} parent=5 // pred_check
        %p541 = pneg %p540
      $region46: #{tpu_custom_call.1} parent=5 // pred_check_branch
        %543 = sbr.rel (%p541) target = $region48
      $region47: #{tpu_custom_call.1} parent=5 // pred_region
        %s544 = ssub.s32 %s16, 2
        // Predicated region
        $region49: #{tpu_custom_call.1} parent=47 // pred_check
          %p545 = pneg %p113
        $region50: #{tpu_custom_call.1} parent=47 // pred_check_branch
          %547 = sbr.rel (%p545) target = $region52
        $region51: #{tpu_custom_call.1} parent=47 // pred_region
          %s548 = sand.u32 %s98, 1
          %s549 = scalar_lea.sflag [#allocation4], %s548
          %s550 = sand.u32 %s98, 1
          %s551 = smul.addr %s550, 64
          %s552 = scalar_lea.vmem [#allocation7], %s551
          %553 = dma.done %s549, 1024
        $region52: #{tpu_custom_call.1} parent=47 // pred_fallthru
          _
      $region48: #{tpu_custom_call.1} parent=5 // pred_fallthru
        _
    $region6: #{tpu_custom_call.1} parent=1 // loop_footer
      %s20 = sadd.s32 1, %s16
    $region7: #{tpu_custom_call.1} parent=1 // loop_footer_branch
      %15 = sbr.rel target = $region3
    $region8: #{tpu_custom_call.1} parent=1 // loop_exit
      _
    %554 = vsyncpa [#allocation3], 1
    %s555 = scalar_lea.sflag [#allocation3], 1
    %556 = vsyncpa %s555, 1
    %557 = vsyncpa [#allocation6], 1
    %558 = vsyncpa [#allocation4], 1
    %s559 = scalar_lea.sflag [#allocation4], 1
    %560 = vsyncpa %s559, 1

</llo_original>
